<compile_context>
chip_gen: v5e
topology: v5e:2x2
jax: 0.10.0
libtpu: 0.0.40
codegen_flags: <defaults>
</compile_context>

<pallas_src>
import functools

import jax
import jax.numpy as jnp
from jax.experimental import pallas as pl
from jax.experimental.pallas import tpu as pltpu


def _bert_pooler_kernel(x_ref, w_ref, b_ref, o_ref, acc_ref, *,
                        seq_len, block_seq, slab, inv_seq_len):
    """x_ref: [TB, TS, H]; w_ref: [H, H] ([out, in]); b_ref: [1, H];
    o_ref: [TB, H]; acc_ref: [TB, H] f32 scratch (raw sequence sum)."""
    k = pl.program_id(1)

    @pl.when(k == 0)
    def _init():
        acc_ref[...] = jnp.zeros_like(acc_ref)

    has_partial = (seq_len % block_seq) != 0      # static Python bool

    def _accumulate(start_row):
        x = x_ref[:, pl.ds(start_row, slab), :]
        if has_partial:
            # Mask rows that lie beyond the true sequence length (the padded
            # tail of the last, partial seq tile contains unspecified data).
            pos = (k * block_seq + start_row
                   + jax.lax.broadcasted_iota(jnp.int32, (1, slab, 1), 1))
            x = jnp.where(pos < seq_len, x, jnp.zeros((), x.dtype))
        # f32 accumulation without materializing an f32 upcast of the whole
        # streamed tile: the live range is bounded to one slab.
        acc_ref[...] += jnp.sum(x, axis=1, dtype=jnp.float32)

    n_slabs = block_seq // slab
    if n_slabs == 1:
        _accumulate(0)
    else:
        def _body(s, carry):
            _accumulate(pl.multiple_of(s * slab, slab))
            return carry
        jax.lax.fori_loop(0, n_slabs, _body, 0, unroll=(n_slabs <= 8))

    @pl.when(k == pl.num_programs(1) - 1)
    def _finalize():
        # Fold 1/S into the small [TB, H] accumulator once.
        mean_tok = acc_ref[...] * inv_seq_len                       # f32 [TB, H]
        # x @ W^T on the MXU without a wrapper-side transpose of W:
        # contract dim 1 of mean_tok with dim 1 of W ([out, in] layout).
        y = jax.lax.dot_general(
            mean_tok.astype(w_ref.dtype), w_ref[...],
            dimension_numbers=(((1,), (1,)), ((), ())),
            preferred_element_type=jnp.float32)                     # [TB, H]
        y = y + b_ref[...].astype(jnp.float32)                      # f32 epilogue
        o_ref[...] = jnp.tanh(y).astype(o_ref.dtype)


def _vmem_capacity_bytes():
    try:
        return max(int(pltpu.get_tpu_info().vmem_capacity_bytes), 32 << 20)
    except Exception:
        return 64 << 20          # conservative: v7x per-core VMEM


def _batch_tile_candidates(batch):
    """Multiple-of-8 divisors of B (legal second-minor output blocks) plus B
    itself (full-dim exception)."""
    cands = {d for d in range(8, batch + 1, 8) if batch % d == 0}
    cands.add(batch)
    return sorted(cands)


def _pick_tiles(batch, seq, hidden, x_item, out_item, budget_x, align, slab_cap):
    """Pick (TB, TS) so that the double-buffered [TB, TS, H] x tile plus the
    per-TB accumulator/output blocks fit `budget_x`, preferring (a) >=2 batch
    grid steps (dual-TensorCore sharding on v7x) and (b) >=min(S,512)-row
    sequence tiles (amortizes the ~0.35us/grid-step overhead)."""
    cands = _batch_tile_candidates(batch)
    multi = [d for d in cands if batch // d >= 2]
    pool = multi if multi else cands

    def ts_for(tb):
        per_tb = tb * hidden * (4 + 2 * out_item)        # f32 acc + 2x out block
        avail = budget_x - per_tb
        if avail <= 0:
            return 0
        ts = avail // (2 * tb * hidden * x_item)         # double-buffered x tile
        if ts >= seq:
            return seq
        ts = (ts // align) * align
        if ts > slab_cap:
            ts = (ts // slab_cap) * slab_cap             # keep slab divisibility
        return int(ts)

    target_ts = min(seq, 512)
    good = [tb for tb in pool if ts_for(tb) >= target_ts]
    if good:
        tb = max(good)
    else:
        tb = max(pool, key=lambda d: d * max(ts_for(d), 1))
    ts = ts_for(tb)
    if ts < min(seq, align):
        # Budget too small for even one aligned slab: smallest legal tile.
        tb = min(pool)
        ts = min(seq, align)
    return tb, ts


def bert_pooler(hidden_states, weight, bias, *,
                seq_tile=None, batch_tile=None, reduce_slab=512):
    """hidden_states: [B, S, H]; weight: [H, H] (PyTorch [out, in]); bias: [H].

    Note: the [H, H] weight is kept VMEM-resident (true for BERT hidden sizes);
    an output-feature tiling would be needed for very large H."""
    B, S, H = hidden_states.shape
    x_item = jnp.dtype(hidden_states.dtype).itemsize
    w_item = jnp.dtype(weight.dtype).itemsize
    b_item = jnp.dtype(bias.dtype).itemsize
    out_item = x_item

    # Sublane packing: f32 -> 8-row, bf16 -> 16-row, int8/fp8 -> 32-row align.
    align = max(8, 32 // x_item)

    # Per-generation VMEM budget (v5e/v6e: 128 MiB physical, v7x: 64 MiB/core).
    cap = _vmem_capacity_bytes()
    vmem_limit = int(cap * 0.78)        # ~100 MiB on 128 MiB parts, ~50 on v7x
    budget = int(vmem_limit * 0.80)     # headroom for Mosaic internal scratch

    use_single_resident = hasattr(pl, "Buffered")
    resident_bufs = 1 if use_single_resident else 2
    budget_x = budget - resident_bufs * (H * H * w_item + H * b_item)

    tb_auto, ts_auto = _pick_tiles(B, S, H, x_item, out_item,
                                   budget_x, align, reduce_slab)
    TB = batch_tile if batch_tile is not None else tb_auto
    TS = min(seq_tile if seq_tile is not None else ts_auto, S)
    assert B % TB == 0 and (TB % 8 == 0 or TB == B), "bad batch tile"
    assert TS == S or TS % 8 == 0, "seq tile must be a multiple of 8 (or S)"

    slab = reduce_slab if (TS > reduce_slab and TS % reduce_slab == 0) else TS
    grid = (B // TB, pl.cdiv(S, TS))                 # reduction (seq) axis last

    bias2d = bias.reshape(1, H)                      # lane-dense 2D bias

    kernel = functools.partial(
        _bert_pooler_kernel,
        seq_len=S, block_seq=TS, slab=slab, inv_seq_len=1.0 / S)

    cost = pl.CostEstimate(
        flops=int(2 * B * H * H + B * S * H),
        transcendentals=int(B * H),
        bytes_accessed=int(B * S * H * x_item + H * H * w_item
                           + H * b_item + B * H * out_item))

    def build(single_resident):
        if single_resident:
            # Constant index maps -> one resident buffer is enough; frees VMEM.
            w_spec = pl.BlockSpec((H, H), lambda i, k: (0, 0),
                                  pipeline_mode=pl.Buffered(1))
            b_spec = pl.BlockSpec((1, H), lambda i, k: (0, 0),
                                  pipeline_mode=pl.Buffered(1))
        else:
            w_spec = pl.BlockSpec((H, H), lambda i, k: (0, 0))
            b_spec = pl.BlockSpec((1, H), lambda i, k: (0, 0))
        return pl.pallas_call(
            kernel,
            out_shape=jax.ShapeDtypeStruct((B, H), hidden_states.dtype),
            grid_spec=pltpu.PrefetchScalarGridSpec(
                num_scalar_prefetch=0,
                grid=grid,
                in_specs=[
                    pl.BlockSpec((TB, TS, H), lambda i, k: (i, k, 0)),  # streamed
                    w_spec,                                             # resident
                    b_spec,                                             # resident
                ],
                out_specs=pl.BlockSpec((TB, H), lambda i, k: (i, 0)),
                scratch_shapes=[pltpu.VMEM((TB, H), jnp.float32)],
            ),
            compiler_params=pltpu.CompilerParams(
                dimension_semantics=("parallel", "arbitrary"),
                vmem_limit_bytes=vmem_limit,
            ),
            cost_estimate=cost,
        )

    if use_single_resident:
        try:
            return build(True)(hidden_states, weight, bias2d)
        except Exception:
            pass  # pipeline_mode=Buffered(1) unsupported here: use the default
    return build(False)(hidden_states, weight, bias2d)


if __name__ == "__main__":
    key = jax.random.PRNGKey(0)
    k_x1, k_w, k_b, k_x2, k_x3, k_x4 = jax.random.split(key, 6)

    B, H = 2, 32
    weight = jax.random.normal(k_w, (H, H), dtype=jnp.float32) * 0.02
    bias = jax.random.normal(k_b, (H,), dtype=jnp.float32) * 0.02

    def ref_pooler(x):
        return jnp.tanh(jnp.mean(x.astype(jnp.float32), axis=1) @ weight.T + bias)

    # 1) Tiny default path (single seq step, auto tiles).
    x1 = jax.random.normal(k_x1, (B, 8, H), dtype=jnp.float32)
    out1 = jax.block_until_ready(bert_pooler(x1, weight, bias))
    assert out1.shape == (B, H)
    assert jnp.allclose(out1, ref_pooler(x1), atol=1e-5, rtol=1e-5)

    # 2) Multi-step seq reduction with a partial (masked) last tile: S=40, TS=16.
    x2 = jax.random.normal(k_x2, (B, 40, H), dtype=jnp.float32)
    out2 = jax.block_until_ready(bert_pooler(x2, weight, bias, seq_tile=16))
    assert jnp.allclose(out2, ref_pooler(x2), atol=1e-5, rtol=1e-5)

    # 3) Slab-chunked in-tile reduction (fori_loop path): TS=32, slab=8.
    x3 = jax.random.normal(k_x3, (B, 64, H), dtype=jnp.float32)
    out3 = jax.block_until_ready(
        bert_pooler(x3, weight, bias, seq_tile=32, reduce_slab=8))
    assert jnp.allclose(out3, ref_pooler(x3), atol=1e-5, rtol=1e-5)

    # 4) bf16 streaming (f32 accumulation inside the kernel).
    x4 = jax.random.normal(k_x4, (B, 16, H), dtype=jnp.bfloat16)
    out4 = jax.block_until_ready(bert_pooler(x4, weight, bias))
    assert out4.dtype == jnp.bfloat16
    assert jnp.allclose(out4.astype(jnp.float32), ref_pooler(x4),
                        atol=2e-2, rtol=2e-2)

    print("KERNEL_OK")
</pallas_src>

<mosaic_0001>
module attributes {stable_mosaic.version = 11 : i64} {
  func.func @_bert_pooler_kernel(%arg0: i32, %arg1: i32, %arg2: memref<2x8x32xf32, #tpu.memory_space<vmem>>, %arg3: memref<32x32xf32, #tpu.memory_space<vmem>>, %arg4: memref<1x32xf32, #tpu.memory_space<vmem>>, %arg5: memref<2x32xf32, #tpu.memory_space<vmem>>, %arg6: memref<2x32xf32, #tpu.memory_space<vmem>>) attributes {dimension_semantics = [#tpu.dimension_semantics<parallel>, #tpu.dimension_semantics<arbitrary>], iteration_bounds = array<i64: 1, 1>, scalar_prefetch = 0 : i64, scratch_operands = 1 : i64, tpu.core_type = #tpu.core_type<tc>, window_params = [{transform_indices = @transform_0, window_bounds = array<i64: 2, 8, 32>}, {pipeline_mode = #tpu.pipeline_mode<synchronous>, transform_indices = @transform_1, window_bounds = array<i64: 32, 32>}, {pipeline_mode = #tpu.pipeline_mode<synchronous>, transform_indices = @transform_2, window_bounds = array<i64: 1, 32>}, {transform_indices = @transform_3, window_bounds = array<i64: 2, 32>}]} {
    %c0_i32 = arith.constant 0 : i32
    %0 = arith.cmpi eq, %arg1, %c0_i32 : i32
    %1 = arith.extui %0 : i1 to i32
    %c0_i32_0 = arith.constant 0 : i32
    %2 = arith.cmpi ne, %1, %c0_i32_0 : i32
    scf.if %2 {
      %cst_9 = arith.constant 0.000000e+00 : f32
      %11 = vector.broadcast %cst_9 : f32 to vector<2x32xf32>
      %c0_10 = arith.constant 0 : index
      %c0_11 = arith.constant 0 : index
      %12 = vector.load %arg6[%c0_10, %c0_11] : memref<2x32xf32, #tpu.memory_space<vmem>>, vector<2x32xf32>
      tpu.vector_store %arg6[%c0_10, %c0_11], %11 {strides = array<i32>} : memref<2x32xf32, #tpu.memory_space<vmem>>, vector<2x32xf32>,
    } else {
    }
    %c0 = arith.constant 0 : index
    %c0_1 = arith.constant 0 : index
    %c0_2 = arith.constant 0 : index
    %3 = vector.load %arg2[%c0, %c0_1, %c0_2] : memref<2x8x32xf32, #tpu.memory_space<vmem>>, vector<2x8x32xf32>
    %c0_3 = arith.constant 0 : index
    %c0_4 = arith.constant 0 : index
    %4 = vector.load %arg6[%c0_3, %c0_4] : memref<2x32xf32, #tpu.memory_space<vmem>>, vector<2x32xf32>
    %cst = arith.constant dense<0.000000e+00> : vector<2x32xf32>
    %5 = vector.multi_reduction <add>, %3, %cst [1] : vector<2x8x32xf32> to vector<2x32xf32>
    %6 = arith.addf %4, %5 : vector<2x32xf32>
    %c0_5 = arith.constant 0 : index
    %c0_6 = arith.constant 0 : index
    %7 = vector.load %arg6[%c0_5, %c0_6] : memref<2x32xf32, #tpu.memory_space<vmem>>, vector<2x32xf32>
    tpu.vector_store %arg6[%c0_5, %c0_6], %6 {strides = array<i32>} : memref<2x32xf32, #tpu.memory_space<vmem>>, vector<2x32xf32>,
    %c0_i32_7 = arith.constant 0 : i32
    %8 = arith.cmpi eq, %arg1, %c0_i32_7 : i32
    %9 = arith.extui %8 : i1 to i32
    %c0_i32_8 = arith.constant 0 : i32
    %10 = arith.cmpi ne, %9, %c0_i32_8 : i32
    scf.if %10 {
      %c0_9 = arith.constant 0 : index
      %c0_10 = arith.constant 0 : index
      %11 = vector.load %arg6[%c0_9, %c0_10] : memref<2x32xf32, #tpu.memory_space<vmem>>, vector<2x32xf32>
      %cst_11 = arith.constant 1.250000e-01 : f32
      %12 = vector.broadcast %cst_11 : f32 to vector<2x32xf32>
      %13 = arith.mulf %11, %12 : vector<2x32xf32>
      %c0_12 = arith.constant 0 : index
      %c0_13 = arith.constant 0 : index
      %14 = vector.load %arg3[%c0_12, %c0_13] : memref<32x32xf32, #tpu.memory_space<vmem>>, vector<32x32xf32>
      %cst_14 = arith.constant dense<0.000000e+00> : vector<2x32xf32>
      %15 = tpu.matmul %13, %14, %cst_14 {dimension_numbers = #tpu.dot_dimension_numbers<[1], [1], [0], [0], [0, 0, 1, 0], [], []>} : vector<2x32xf32>, vector<32x32xf32>, vector<2x32xf32> -> vector<2x32xf32>
      %c0_15 = arith.constant 0 : index
      %c0_16 = arith.constant 0 : index
      %16 = vector.load %arg4[%c0_15, %c0_16] : memref<1x32xf32, #tpu.memory_space<vmem>>, vector<1x32xf32>
      %17 = vector.broadcast %16 : vector<1x32xf32> to vector<2x32xf32>
      %18 = arith.addf %15, %17 : vector<2x32xf32>
      %19 = math.tanh %18 : vector<2x32xf32>
      %c0_17 = arith.constant 0 : index
      %c0_18 = arith.constant 0 : index
      %20 = vector.load %arg5[%c0_17, %c0_18] : memref<2x32xf32, #tpu.memory_space<vmem>>, vector<2x32xf32>
      tpu.vector_store %arg5[%c0_17, %c0_18], %19 {strides = array<i32>} : memref<2x32xf32, #tpu.memory_space<vmem>>, vector<2x32xf32>,
    } else {
    }
    return
  }
  func.func @transform_0(%arg0: i32, %arg1: i32) -> (i32, i32, i32) {
    %c0_i32 = arith.constant 0 : i32
    %c0_i32_0 = arith.constant 0 : i32
    return %arg0, %arg1, %c0_i32 : i32, i32, i32
  }
  func.func @transform_1(%arg0: i32, %arg1: i32) -> (i32, i32) {
    %c0_i32 = arith.constant 0 : i32
    %c0_i32_0 = arith.constant 0 : i32
    %c0_i32_1 = arith.constant 0 : i32
    return %c0_i32, %c0_i32_0 : i32, i32
  }
  func.func @transform_2(%arg0: i32, %arg1: i32) -> (i32, i32) {
    %c0_i32 = arith.constant 0 : i32
    %c0_i32_0 = arith.constant 0 : i32
    %c0_i32_1 = arith.constant 0 : i32
    return %c0_i32, %c0_i32_0 : i32, i32
  }
  func.func @transform_3(%arg0: i32, %arg1: i32) -> (i32, i32) {
    %c0_i32 = arith.constant 0 : i32
    %c0_i32_0 = arith.constant 0 : i32
    return %arg0, %c0_i32 : i32, i32
  }
}

module attributes {stable_mosaic.version = 11 : i64} {
  func.func @_bert_pooler_kernel(%arg0: i32, %arg1: i32, %arg2: memref<2x8x32xf32, #tpu.memory_space<vmem>>, %arg3: memref<32x32xf32, #tpu.memory_space<vmem>>, %arg4: memref<1x32xf32, #tpu.memory_space<vmem>>, %arg5: memref<2x32xf32, #tpu.memory_space<vmem>>, %arg6: memref<2x32xf32, #tpu.memory_space<vmem>>) attributes {dimension_semantics = [#tpu.dimension_semantics<parallel>, #tpu.dimension_semantics<arbitrary>], iteration_bounds = array<i64: 1, 1>, scalar_prefetch = 0 : i64, scratch_operands = 1 : i64, tpu.core_type = #tpu.core_type<tc>, window_params = [{transform_indices = @transform_0, window_bounds = array<i64: 2, 8, 32>}, {pipeline_mode = #tpu.pipeline_mode<synchronous>, transform_indices = @transform_1, window_bounds = array<i64: 32, 32>}, {pipeline_mode = #tpu.pipeline_mode<synchronous>, transform_indices = @transform_2, window_bounds = array<i64: 1, 32>}, {transform_indices = @transform_3, window_bounds = array<i64: 2, 32>}]} {
    %c0_i32 = arith.constant 0 : i32
    %0 = arith.cmpi eq, %arg1, %c0_i32 : i32
    %1 = arith.extui %0 : i1 to i32
    %c0_i32_0 = arith.constant 0 : i32
    %2 = arith.cmpi ne, %1, %c0_i32_0 : i32
    scf.if %2 {
      %cst_9 = arith.constant 0.000000e+00 : f32
      %11 = vector.broadcast %cst_9 : f32 to vector<2x32xf32>
      %c0_10 = arith.constant 0 : index
      %c0_11 = arith.constant 0 : index
      %12 = vector.load %arg6[%c0_10, %c0_11] : memref<2x32xf32, #tpu.memory_space<vmem>>, vector<2x32xf32>
      tpu.vector_store %arg6[%c0_10, %c0_11], %11 {strides = array<i32>} : memref<2x32xf32, #tpu.memory_space<vmem>>, vector<2x32xf32>,
    } else {
    }
    %c0 = arith.constant 0 : index
    %c0_1 = arith.constant 0 : index
    %c0_2 = arith.constant 0 : index
    %3 = vector.load %arg2[%c0, %c0_1, %c0_2] : memref<2x8x32xf32, #tpu.memory_space<vmem>>, vector<2x8x32xf32>
    %c0_3 = arith.constant 0 : index
    %c0_4 = arith.constant 0 : index
    %4 = vector.load %arg6[%c0_3, %c0_4] : memref<2x32xf32, #tpu.memory_space<vmem>>, vector<2x32xf32>
    %cst = arith.constant dense<0.000000e+00> : vector<2x32xf32>
    %5 = vector.multi_reduction <add>, %3, %cst [1] : vector<2x8x32xf32> to vector<2x32xf32>
    %6 = arith.addf %4, %5 : vector<2x32xf32>
    %c0_5 = arith.constant 0 : index
    %c0_6 = arith.constant 0 : index
    %7 = vector.load %arg6[%c0_5, %c0_6] : memref<2x32xf32, #tpu.memory_space<vmem>>, vector<2x32xf32>
    tpu.vector_store %arg6[%c0_5, %c0_6], %6 {strides = array<i32>} : memref<2x32xf32, #tpu.memory_space<vmem>>, vector<2x32xf32>,
    %c0_i32_7 = arith.constant 0 : i32
    %8 = arith.cmpi eq, %arg1, %c0_i32_7 : i32
    %9 = arith.extui %8 : i1 to i32
    %c0_i32_8 = arith.constant 0 : i32
    %10 = arith.cmpi ne, %9, %c0_i32_8 : i32
    scf.if %10 {
      %c0_9 = arith.constant 0 : index
      %c0_10 = arith.constant 0 : index
      %11 = vector.load %arg6[%c0_9, %c0_10] : memref<2x32xf32, #tpu.memory_space<vmem>>, vector<2x32xf32>
      %cst_11 = arith.constant 1.250000e-01 : f32
      %12 = vector.broadcast %cst_11 : f32 to vector<2x32xf32>
      %13 = arith.mulf %11, %12 : vector<2x32xf32>
      %c0_12 = arith.constant 0 : index
      %c0_13 = arith.constant 0 : index
      %14 = vector.load %arg3[%c0_12, %c0_13] : memref<32x32xf32, #tpu.memory_space<vmem>>, vector<32x32xf32>
      %cst_14 = arith.constant dense<0.000000e+00> : vector<2x32xf32>
      %15 = tpu.matmul %13, %14, %cst_14 {dimension_numbers = #tpu.dot_dimension_numbers<[1], [1], [0], [0], [0, 0, 1, 0], [], []>} : vector<2x32xf32>, vector<32x32xf32>, vector<2x32xf32> -> vector<2x32xf32>
      %c0_15 = arith.constant 0 : index
      %c0_16 = arith.constant 0 : index
      %16 = vector.load %arg4[%c0_15, %c0_16] : memref<1x32xf32, #tpu.memory_space<vmem>>, vector<1x32xf32>
      %17 = vector.broadcast %16 : vector<1x32xf32> to vector<2x32xf32>
      %18 = arith.addf %15, %17 : vector<2x32xf32>
      %19 = math.tanh %18 : vector<2x32xf32>
      %c0_17 = arith.constant 0 : index
      %c0_18 = arith.constant 0 : index
      %20 = vector.load %arg5[%c0_17, %c0_18] : memref<2x32xf32, #tpu.memory_space<vmem>>, vector<2x32xf32>
      tpu.vector_store %arg5[%c0_17, %c0_18], %19 {strides = array<i32>} : memref<2x32xf32, #tpu.memory_space<vmem>>, vector<2x32xf32>,
    } else {
    }
    return
  }
  func.func @transform_0(%arg0: i32, %arg1: i32) -> (i32, i32, i32) {
    %c0_i32 = arith.constant 0 : i32
    %c0_i32_0 = arith.constant 0 : i32
    return %arg0, %arg1, %c0_i32 : i32, i32, i32
  }
  func.func @transform_1(%arg0: i32, %arg1: i32) -> (i32, i32) {
    %c0_i32 = arith.constant 0 : i32
    %c0_i32_0 = arith.constant 0 : i32
    %c0_i32_1 = arith.constant 0 : i32
    return %c0_i32, %c0_i32_0 : i32, i32
  }
  func.func @transform_2(%arg0: i32, %arg1: i32) -> (i32, i32) {
    %c0_i32 = arith.constant 0 : i32
    %c0_i32_0 = arith.constant 0 : i32
    %c0_i32_1 = arith.constant 0 : i32
    return %c0_i32, %c0_i32_0 : i32, i32
  }
  func.func @transform_3(%arg0: i32, %arg1: i32) -> (i32, i32) {
    %c0_i32 = arith.constant 0 : i32
    %c0_i32_0 = arith.constant 0 : i32
    return %arg0, %c0_i32 : i32, i32
  }
}

</mosaic_0001>

<llo_original>
// kernel: tpu_custom_call.1
$region0: #{tpu_custom_call.1}
  #allocation0 [shape = 'u32[]', space=smem, size = 0x4, offset = 0x4, fixed_abs, tag = 'smem constant byte address 0x4 - core index']
  #allocation1 [shape = 'u32[72,128]{1,0:T(1,128)}', space=vmem, size = 0x9000, scoped, tag = 'internal scratch']
  #allocation2 [shape = 'f32[2,32]{1,0:T(2,128)}', space=vmem, size = 0x400, scoped, tag = 'scratch operand']
  %s0 = inlined_call_operand.hbm [shape: f32[2,8,32], index: 0, kind: input, shape index: {}]
  %s1 = inlined_call_operand.hbm [shape: f32[32,32], index: 1, kind: input, shape index: {}]
  %s2 = inlined_call_operand.vmem [shape: f32[1,32], index: 2, kind: input, shape index: {}]
  %s3 = inlined_call_operand.hbm [shape: f32[2,32], index: 3, kind: output, shape index: {}]
  %s4 = sld [smem:[#allocation0]]
  $region38: #{tpu_custom_call.1} parent=0
    _
  %s6 = ssub.s32 1, %s4
  %s7 = scalar_select 0, %s6, %s4
  $region1: #{tpu_custom_call.1} parent=0
    #allocation3 [shape = 'u8[8192]{0}', space=vmem, size = 0x2000, scoped, tag = 'input window, operand 0, single buffered']
    #allocation4 [shape = 's32[1]{0}', space=sflag, size = 0x4, scoped, tag = 'scoped memory for tpu_custom_call.1']
    #allocation5 [shape = 's32[1]{0}', space=sflag, size = 0x4, scoped, tag = 'scoped memory for tpu_custom_call.1']
    #allocation6 [shape = 'u8[16384]{0}', space=vmem, size = 0x4000, scoped, tag = 'input window, operand 1, single buffered']
    #allocation7 [shape = 's32[1]{0}', space=sflag, size = 0x4, scoped, tag = 'scoped memory for tpu_custom_call.1']
    #allocation8 [shape = 'u8[1024]{0}', space=vmem, size = 0x400, scoped, tag = 'output window, operand 0, single buffered']
    %8 = vsyncpa [#allocation4], 0
    %9 = vsyncpa [#allocation7], 0
    %10 = vsyncpa [#allocation5], 0
    // Predicated region
    $region2: #{tpu_custom_call.1} parent=1 // pred_check
      _
    $region3: #{tpu_custom_call.1} parent=1 // pred_check_branch
      %12 = sbr.rel (0) target = $region5
    $region4: #{tpu_custom_call.1} parent=1 // pred_region
      %14 = vsyncadd [#allocation4], 0
      %s15 = sshll.u32 %s0, 4
      %s16 = int_to_ptr.hbm [resolvable:$true] %s15
      %s17 = sshll.u32 [#allocation3], 4
      %s18 = int_to_ptr.vmem [resolvable:$true] %s17
      %23 = dma.hbm_to_vmem [thread:$0]  %s16, 256, %s18, [#allocation4], 128, 128, 8
    $region5: #{tpu_custom_call.1} parent=1 // pred_fallthru
      _
    // Predicated region
    $region6: #{tpu_custom_call.1} parent=1 // pred_check
      _
    $region7: #{tpu_custom_call.1} parent=1 // pred_check_branch
      %25 = sbr.rel (0) target = $region9
    $region8: #{tpu_custom_call.1} parent=1 // pred_region
      %27 = vsyncadd [#allocation7], 0
      %s28 = sshll.u32 %s1, 4
      %s29 = int_to_ptr.hbm [resolvable:$true] %s28
      %s30 = sshll.u32 [#allocation6], 4
      %s31 = int_to_ptr.vmem [resolvable:$true] %s30
      %36 = dma.hbm_to_vmem [thread:$0]  %s29, 512, %s31, [#allocation7], 128, 128, 8
    $region9: #{tpu_custom_call.1} parent=1 // pred_fallthru
      _
    // Predicated region
    $region10: #{tpu_custom_call.1} parent=1 // pred_check
      _
    $region11: #{tpu_custom_call.1} parent=1 // pred_check_branch
      %38 = sbr.rel (0) target = $region13
    $region12: #{tpu_custom_call.1} parent=1 // pred_region
      _
    $region13: #{tpu_custom_call.1} parent=1 // pred_fallthru
      _
    // Predicated region
    $region14: #{tpu_custom_call.1} parent=1 // pred_check
      _
    $region15: #{tpu_custom_call.1} parent=1 // pred_check_branch
      %40 = sbr.rel (0) target = $region17
    $region16: #{tpu_custom_call.1} parent=1 // pred_region
      %42 = dma.done [#allocation4], 256
    $region17: #{tpu_custom_call.1} parent=1 // pred_fallthru
      _
    // Predicated region
    $region18: #{tpu_custom_call.1} parent=1 // pred_check
      _
    $region19: #{tpu_custom_call.1} parent=1 // pred_check_branch
      %44 = sbr.rel (0) target = $region21
    $region20: #{tpu_custom_call.1} parent=1 // pred_region
      %46 = dma.done [#allocation7], 512
    $region21: #{tpu_custom_call.1} parent=1 // pred_fallthru
      _
    %p47 = scmp.eq.s32.totalorder 0, 0
    // Predicated region
    $region22: #{tpu_custom_call.1} parent=1 // pred_check
      %p48 = pneg %p47
    $region23: #{tpu_custom_call.1} parent=1 // pred_check_branch
      %50 = sbr.rel (%p48) target = $region25
    $region24: #{tpu_custom_call.1} parent=1 // pred_region
      %vm51 = vcmask 254976
      %52 = vst.msk [vmem:[#allocation2] sm:$0x3] %vm51, 0.0
    $region25: #{tpu_custom_call.1} parent=1 // pred_fallthru
      _
    %v53 = vld [vmem:[#allocation3] sm:$0xff]
    %v54 = vld [vmem:[#allocation3 + $0x8] sm:$0xff]
    %v55 = vld [vmem:[#allocation2] sm:$0x3]
    %vm56 = vcmask 261120
    %v57 = vsel %vm56, %v53, 0.0
    %v58 = vrot.slane %v57, 4
    %v59 = vadd.f32 %v57, %v58
    %v60 = vrot.slane %v59, 2
    %v61 = vadd.f32 %v59, %v60
    %v62 = vrot.slane %v61, 1
    %v63 = vadd.f32 %v61, %v62
    %v64 = vsel %vm56, %v54, 0.0
    %v65 = vrot.slane %v64, 4
    %v66 = vadd.f32 %v64, %v65
    %v67 = vrot.slane %v66, 2
    %v68 = vadd.f32 %v66, %v67
    %v69 = vrot.slane %v68, 1
    %v70 = vadd.f32 %v68, %v69
    %vm73 = vcmask 1041409
    %v74 = vsel %vm73, %v70, %v63
    %v76 = vadd.f32 %v55, %v74
    %vm77 = vcmask 254976
    %78 = vst.msk [vmem:[#allocation2] sm:$0x3] %vm77, %v76
    // Predicated region
    $region26: #{tpu_custom_call.1} parent=1 // pred_check
      %p79 = pneg %p47
    $region27: #{tpu_custom_call.1} parent=1 // pred_check_branch
      %81 = sbr.rel (%p79) target = $region29
    $region28: #{tpu_custom_call.1} parent=1 // pred_region
      %v82 = vld [vmem:[#allocation2] sm:$0x3]
      %v83 = vmul.f32 %v82, 0.125
      %v84 = vld [vmem:[#allocation6] sm:$0xff]
      %v85 = vld [vmem:[#allocation6 + $0x8] sm:$0xff]
      %v86 = vld [vmem:[#allocation6 + $0x10] sm:$0xff]
      %v87 = vld [vmem:[#allocation6 + $0x18] sm:$0xff]
      %v88 = vld [vmem:[%s2] sm:$0x1]
      %v90 = vperm.slane %v88, 0
      %v93 = vsel %vm56, %v83, 0
      %v96 = vsel %vm56, %v84, 0
      %v99 = vsel %vm56, %v85, 0
      %v102 = vsel %vm56, %v86, 0
      %v105 = vsel %vm56, %v87, 0
      %107 = vmatpush.xpose.msra.mxu0 0.0
      %108 = vmatpush.xpose.msra.mxu0 0.0
      %109 = vmatpush.xpose.msra.mxu0 0.0
      %110 = vmatpush.xpose.msra.mxu0 0.0
      %111 = vmatpush.xpose.msra.mxu0 0.0
      %112 = vmatpush.xpose.msra.mxu0 0.0
      %113 = vmatpush.xpose.msra.mxu0 0.0
      %114 = vmatpush.xpose.msra.mxu0 0.0
      %115 = vmatpush.xpose.msra.mxu0 0.0
      %116 = vmatpush.xpose.msra.mxu0 0.0
      %117 = vmatpush.xpose.msra.mxu0 0.0
      %118 = vmatpush.xpose.msra.mxu0 0.0
      %119 = vmatpush.xpose.msra.mxu0 %v105
      %120 = vmatpush.xpose.msra.mxu0 %v102
      %121 = vmatpush.xpose.msra.mxu0 %v99
      %122 = vmatpush.xpose.msra.mxu0 %v96
      %123 = vmatmul.f32.gmra.mxu0 %v93
      %v124 = vpop.f32.mrf.mxu0
      %v125 = vadd.f32 %v90, %v124
      %126 = vdwg.mxu0
      %v127 = vtanh.pop %v125
      %128 = vst.msk [vmem:[#allocation8] sm:$0x3] %vm77, %v127
    $region29: #{tpu_custom_call.1} parent=1 // pred_fallthru
      _
    // Predicated region
    $region30: #{tpu_custom_call.1} parent=1 // pred_check
      _
    $region31: #{tpu_custom_call.1} parent=1 // pred_check_branch
      %130 = sbr.rel (0) target = $region33
    $region32: #{tpu_custom_call.1} parent=1 // pred_region
      %132 = vsyncadd [#allocation5], 0
      %s134 = sshll.u32 [#allocation8], 4
      %s135 = int_to_ptr.vmem [resolvable:$true] %s134
      %s136 = sshll.u32 %s3, 4
      %s137 = int_to_ptr.hbm [resolvable:$true] %s136
      %139 = dma.vmem_to_hbm [thread:$0]  %s135, 32, %s137, [#allocation5]
    $region33: #{tpu_custom_call.1} parent=1 // pred_fallthru
      _
    // Predicated region
    $region34: #{tpu_custom_call.1} parent=1 // pred_check
      _
    $region35: #{tpu_custom_call.1} parent=1 // pred_check_branch
      %141 = sbr.rel (0) target = $region37
    $region36: #{tpu_custom_call.1} parent=1 // pred_region
      %143 = dma.done [#allocation5], 32
    $region37: #{tpu_custom_call.1} parent=1 // pred_fallthru
      _
    %144 = vsyncpa [#allocation4], 1
    %145 = vsyncpa [#allocation7], 1
    %146 = vsyncpa [#allocation5], 1

// kernel: tpu_custom_call.1
$region0: #{tpu_custom_call.1}
  #allocation0 [shape = 'u32[]', space=smem, size = 0x4, offset = 0x4, fixed_abs, tag = 'smem constant byte address 0x4 - core index']
  #allocation1 [shape = 'u32[72,128]{1,0:T(1,128)}', space=vmem, size = 0x9000, scoped, tag = 'internal scratch']
  #allocation2 [shape = 'f32[2,32]{1,0:T(2,128)}', space=vmem, size = 0x400, scoped, tag = 'scratch operand']
  %s0 = inlined_call_operand.hbm [shape: f32[2,8,32], index: 0, kind: input, shape index: {}]
  %s1 = inlined_call_operand.hbm [shape: f32[32,32], index: 1, kind: input, shape index: {}]
  %s2 = inlined_call_operand.vmem [shape: f32[1,32], index: 2, kind: input, shape index: {}]
  %s3 = inlined_call_operand.hbm [shape: f32[2,32], index: 3, kind: output, shape index: {}]
  %s4 = sld [smem:[#allocation0]]
  $region38: #{tpu_custom_call.1} parent=0
    _
  %s6 = ssub.s32 1, %s4
  %s7 = scalar_select 0, %s6, %s4
  $region1: #{tpu_custom_call.1} parent=0
    #allocation3 [shape = 'u8[8192]{0}', space=vmem, size = 0x2000, scoped, tag = 'input window, operand 0, single buffered']
    #allocation4 [shape = 's32[1]{0}', space=sflag, size = 0x4, scoped, tag = 'scoped memory for tpu_custom_call.1']
    #allocation5 [shape = 's32[1]{0}', space=sflag, size = 0x4, scoped, tag = 'scoped memory for tpu_custom_call.1']
    #allocation6 [shape = 'u8[16384]{0}', space=vmem, size = 0x4000, scoped, tag = 'input window, operand 1, single buffered']
    #allocation7 [shape = 's32[1]{0}', space=sflag, size = 0x4, scoped, tag = 'scoped memory for tpu_custom_call.1']
    #allocation8 [shape = 'u8[1024]{0}', space=vmem, size = 0x400, scoped, tag = 'output window, operand 0, single buffered']
    %8 = vsyncpa [#allocation4], 0
    %9 = vsyncpa [#allocation7], 0
    %10 = vsyncpa [#allocation5], 0
    // Predicated region
    $region2: #{tpu_custom_call.1} parent=1 // pred_check
      _
    $region3: #{tpu_custom_call.1} parent=1 // pred_check_branch
      %12 = sbr.rel (0) target = $region5
    $region4: #{tpu_custom_call.1} parent=1 // pred_region
      %14 = vsyncadd [#allocation4], 0
      %s15 = sshll.u32 %s0, 4
      %s16 = int_to_ptr.hbm [resolvable:$true] %s15
      %s17 = sshll.u32 [#allocation3], 4
      %s18 = int_to_ptr.vmem [resolvable:$true] %s17
      %23 = dma.hbm_to_vmem [thread:$0]  %s16, 256, %s18, [#allocation4], 128, 128, 8
    $region5: #{tpu_custom_call.1} parent=1 // pred_fallthru
      _
    // Predicated region
    $region6: #{tpu_custom_call.1} parent=1 // pred_check
      _
    $region7: #{tpu_custom_call.1} parent=1 // pred_check_branch
      %25 = sbr.rel (0) target = $region9
    $region8: #{tpu_custom_call.1} parent=1 // pred_region
      %27 = vsyncadd [#allocation7], 0
      %s28 = sshll.u32 %s1, 4
      %s29 = int_to_ptr.hbm [resolvable:$true] %s28
      %s30 = sshll.u32 [#allocation6], 4
      %s31 = int_to_ptr.vmem [resolvable:$true] %s30
      %36 = dma.hbm_to_vmem [thread:$0]  %s29, 512, %s31, [#allocation7], 128, 128, 8
    $region9: #{tpu_custom_call.1} parent=1 // pred_fallthru
      _
    // Predicated region
    $region10: #{tpu_custom_call.1} parent=1 // pred_check
      _
    $region11: #{tpu_custom_call.1} parent=1 // pred_check_branch
      %38 = sbr.rel (0) target = $region13
    $region12: #{tpu_custom_call.1} parent=1 // pred_region
      _
    $region13: #{tpu_custom_call.1} parent=1 // pred_fallthru
      _
    // Predicated region
    $region14: #{tpu_custom_call.1} parent=1 // pred_check
      _
    $region15: #{tpu_custom_call.1} parent=1 // pred_check_branch
      %40 = sbr.rel (0) target = $region17
    $region16: #{tpu_custom_call.1} parent=1 // pred_region
      %42 = dma.done [#allocation4], 256
    $region17: #{tpu_custom_call.1} parent=1 // pred_fallthru
      _
    // Predicated region
    $region18: #{tpu_custom_call.1} parent=1 // pred_check
      _
    $region19: #{tpu_custom_call.1} parent=1 // pred_check_branch
      %44 = sbr.rel (0) target = $region21
    $region20: #{tpu_custom_call.1} parent=1 // pred_region
      %46 = dma.done [#allocation7], 512
    $region21: #{tpu_custom_call.1} parent=1 // pred_fallthru
      _
    %p47 = scmp.eq.s32.totalorder 0, 0
    // Predicated region
    $region22: #{tpu_custom_call.1} parent=1 // pred_check
      %p48 = pneg %p47
    $region23: #{tpu_custom_call.1} parent=1 // pred_check_branch
      %50 = sbr.rel (%p48) target = $region25
    $region24: #{tpu_custom_call.1} parent=1 // pred_region
      %vm51 = vcmask 254976
      %52 = vst.msk [vmem:[#allocation2] sm:$0x3] %vm51, 0.0
    $region25: #{tpu_custom_call.1} parent=1 // pred_fallthru
      _
    %v53 = vld [vmem:[#allocation3] sm:$0xff]
    %v54 = vld [vmem:[#allocation3 + $0x8] sm:$0xff]
    %v55 = vld [vmem:[#allocation2] sm:$0x3]
    %vm56 = vcmask 261120
    %v57 = vsel %vm56, %v53, 0.0
    %v58 = vrot.slane %v57, 4
    %v59 = vadd.f32 %v57, %v58
    %v60 = vrot.slane %v59, 2
    %v61 = vadd.f32 %v59, %v60
    %v62 = vrot.slane %v61, 1
    %v63 = vadd.f32 %v61, %v62
    %v64 = vsel %vm56, %v54, 0.0
    %v65 = vrot.slane %v64, 4
    %v66 = vadd.f32 %v64, %v65
    %v67 = vrot.slane %v66, 2
    %v68 = vadd.f32 %v66, %v67
    %v69 = vrot.slane %v68, 1
    %v70 = vadd.f32 %v68, %v69
    %vm73 = vcmask 1041409
    %v74 = vsel %vm73, %v70, %v63
    %v76 = vadd.f32 %v55, %v74
    %vm77 = vcmask 254976
    %78 = vst.msk [vmem:[#allocation2] sm:$0x3] %vm77, %v76
    // Predicated region
    $region26: #{tpu_custom_call.1} parent=1 // pred_check
      %p79 = pneg %p47
    $region27: #{tpu_custom_call.1} parent=1 // pred_check_branch
      %81 = sbr.rel (%p79) target = $region29
    $region28: #{tpu_custom_call.1} parent=1 // pred_region
      %v82 = vld [vmem:[#allocation2] sm:$0x3]
      %v83 = vmul.f32 %v82, 0.125
      %v84 = vld [vmem:[#allocation6] sm:$0xff]
      %v85 = vld [vmem:[#allocation6 + $0x8] sm:$0xff]
      %v86 = vld [vmem:[#allocation6 + $0x10] sm:$0xff]
      %v87 = vld [vmem:[#allocation6 + $0x18] sm:$0xff]
      %v88 = vld [vmem:[%s2] sm:$0x1]
      %v90 = vperm.slane %v88, 0
      %v93 = vsel %vm56, %v83, 0
      %v96 = vsel %vm56, %v84, 0
      %v99 = vsel %vm56, %v85, 0
      %v102 = vsel %vm56, %v86, 0
      %v105 = vsel %vm56, %v87, 0
      %107 = vmatpush.xpose.msra.mxu0 0.0
      %108 = vmatpush.xpose.msra.mxu0 0.0
      %109 = vmatpush.xpose.msra.mxu0 0.0
      %110 = vmatpush.xpose.msra.mxu0 0.0
      %111 = vmatpush.xpose.msra.mxu0 0.0
      %112 = vmatpush.xpose.msra.mxu0 0.0
      %113 = vmatpush.xpose.msra.mxu0 0.0
      %114 = vmatpush.xpose.msra.mxu0 0.0
      %115 = vmatpush.xpose.msra.mxu0 0.0
      %116 = vmatpush.xpose.msra.mxu0 0.0
      %117 = vmatpush.xpose.msra.mxu0 0.0
      %118 = vmatpush.xpose.msra.mxu0 0.0
      %119 = vmatpush.xpose.msra.mxu0 %v105
      %120 = vmatpush.xpose.msra.mxu0 %v102
      %121 = vmatpush.xpose.msra.mxu0 %v99
      %122 = vmatpush.xpose.msra.mxu0 %v96
      %123 = vmatmul.f32.gmra.mxu0 %v93
      %v124 = vpop.f32.mrf.mxu0
      %v125 = vadd.f32 %v90, %v124
      %126 = vdwg.mxu0
      %v127 = vtanh.pop %v125
      %128 = vst.msk [vmem:[#allocation8] sm:$0x3] %vm77, %v127
    $region29: #{tpu_custom_call.1} parent=1 // pred_fallthru
      _
    // Predicated region
    $region30: #{tpu_custom_call.1} parent=1 // pred_check
      _
    $region31: #{tpu_custom_call.1} parent=1 // pred_check_branch
      %130 = sbr.rel (0) target = $region33
    $region32: #{tpu_custom_call.1} parent=1 // pred_region
      %132 = vsyncadd [#allocation5], 0
      %s134 = sshll.u32 [#allocation8], 4
      %s135 = int_to_ptr.vmem [resolvable:$true] %s134
      %s136 = sshll.u32 %s3, 4
      %s137 = int_to_ptr.hbm [resolvable:$true] %s136
      %139 = dma.vmem_to_hbm [thread:$0]  %s135, 32, %s137, [#allocation5]
    $region33: #{tpu_custom_call.1} parent=1 // pred_fallthru
      _
    // Predicated region
    $region34: #{tpu_custom_call.1} parent=1 // pred_check
      _
    $region35: #{tpu_custom_call.1} parent=1 // pred_check_branch
      %141 = sbr.rel (0) target = $region37
    $region36: #{tpu_custom_call.1} parent=1 // pred_region
      %143 = dma.done [#allocation5], 32
    $region37: #{tpu_custom_call.1} parent=1 // pred_fallthru
      _
    %144 = vsyncpa [#allocation4], 1
    %145 = vsyncpa [#allocation7], 1
    %146 = vsyncpa [#allocation5], 1

</llo_original>
